<compile_context>
chip_gen: v6e
topology: v6e:2x2x1
jax: 0.10.0
libtpu: 0.0.40
codegen_flags: <defaults>
</compile_context>

<pallas_src>
import functools

import jax
import jax.numpy as jnp
from jax import lax
from jax.experimental import pallas as pl
from jax.experimental.pallas import tpu as pltpu


def _round_up(x, m):
    return ((x + m - 1) // m) * m


# ---------------------------------------------------------------------------
# Kernel 1: per-relation message transform  M[r] = X @ W[r]   (bf16 output)
# ---------------------------------------------------------------------------
def _msg_kernel(x_ref, w_ref, out_ref):
    out_ref[0] = jnp.dot(
        x_ref[...], w_ref[0], preferred_element_type=jnp.float32
    ).astype(out_ref.dtype)


def _compute_messages(x, w_rel, tile_m):
    num_rels, din, dout_p = w_rel.shape
    n_pad = x.shape[0]
    grid = (num_rels, n_pad // tile_m)
    return pl.pallas_call(
        _msg_kernel,
        out_shape=jax.ShapeDtypeStruct((num_rels, n_pad, dout_p), jnp.bfloat16),
        grid_spec=pltpu.PrefetchScalarGridSpec(
            num_scalar_prefetch=0,
            grid=grid,
            in_specs=[
                pl.BlockSpec((tile_m, din), lambda r, m: (m, 0)),
                pl.BlockSpec((1, din, dout_p), lambda r, m: (r, 0, 0)),
            ],
            out_specs=pl.BlockSpec((1, tile_m, dout_p), lambda r, m: (r, m, 0)),
        ),
        compiler_params=pltpu.CompilerParams(
            dimension_semantics=("parallel", "parallel")),
    )(x, w_rel)


# ---------------------------------------------------------------------------
# Kernel 2: relation aggregation + self-loop + bias + ReLU + BN partial stats
# grid = (dst_tiles, num_rels, src_tiles)   ("parallel", "arbitrary", "arbitrary")
# ---------------------------------------------------------------------------
def _rgcn_agg_kernel(num_rels, src_tiles, n_true, tile_d,
                     occ_ref, fi_ref, fr_ref, fk_ref,
                     adj_ref, msg_ref, x_ref, wself_ref, bias_ref,
                     h_ref, ssum_ref, ssq_ref, acc_ref):
    i = pl.program_id(0)
    r = pl.program_id(1)
    k = pl.program_id(2)

    # Fold the self-loop matmul + bias into the accumulator init so it overlaps
    # with the first adjacency DMA instead of sitting in the epilogue.
    @pl.when(jnp.logical_and(r == 0, k == 0))
    def _():
        acc_ref[...] = (jnp.dot(x_ref[...], wself_ref[...],
                                preferred_element_type=jnp.float32)
                        + bias_ref[...])

    # Block-sparse gate: skip the matmul on empty adjacency tiles.
    flat = (i * num_rels + r) * src_tiles + k

    @pl.when(occ_ref[flat] > 0)
    def _():
        acc_ref[...] += jnp.dot(adj_ref[0], msg_ref[0],
                                preferred_element_type=jnp.float32)

    @pl.when(jnp.logical_and(r == num_rels - 1, k == src_tiles - 1))
    def _():
        h = jnp.maximum(acc_ref[...], 0.0)           # bias + ReLU inside conv
        h_ref[...] = h
        # BatchNorm partial statistics (mask padded node rows).
        row = i * tile_d + lax.broadcasted_iota(jnp.int32, h.shape, 0)
        hm = jnp.where(row < n_true, h, 0.0)
        ssum_ref[0] = jnp.sum(hm, axis=0, keepdims=True)
        ssq_ref[0] = jnp.sum(hm * hm, axis=0, keepdims=True)


def _rgcn_aggregate(occ, fi, fr, fk, adj, msg, x, w_self, bias,
                    *, tile_d, tile_s, n_true):
    num_rels, n_pad, _ = adj.shape
    din = x.shape[1]
    dout_p = w_self.shape[1]
    dst_tiles = n_pad // tile_d
    src_tiles = n_pad // tile_s

    def adj_map(i, r, k, occ_r, fi_r, fr_r, fk_r):
        f = (i * num_rels + r) * src_tiles + k
        # carried coordinates -> empty tiles repeat the previous block index,
        # so Pallas skips their (dominant) adjacency DMA.
        return (fr_r[f], fi_r[f], fk_r[f])

    def msg_map(i, r, k, occ_r, fi_r, fr_r, fk_r):
        f = (i * num_rels + r) * src_tiles + k
        return (fr_r[f], fk_r[f], 0)

    def x_map(i, r, k, occ_r, fi_r, fr_r, fk_r):
        return (i, 0)

    def const_map(i, r, k, occ_r, fi_r, fr_r, fk_r):
        return (0, 0)

    def out_map(i, r, k, occ_r, fi_r, fr_r, fk_r):
        return (i, 0)

    def stat_map(i, r, k, occ_r, fi_r, fr_r, fk_r):
        return (i, 0, 0)

    kernel = functools.partial(_rgcn_agg_kernel, num_rels, src_tiles,
                               n_true, tile_d)

    # Rough VMEM budget: double-buffered streamed tiles + resident accumulator.
    est = (2 * tile_d * tile_s * 2       # adjacency tiles (bf16)
           + 2 * tile_s * dout_p * 2     # message tiles (bf16)
           + 2 * tile_d * din * 4        # x tiles
           + 2 * din * dout_p * 4        # self-loop weight
           + 2 * tile_d * dout_p * 4     # h output tiles
           + tile_d * dout_p * 4)        # accumulator
    vmem_limit = int(max(32 * 1024 * 1024, 2 * est))

    return pl.pallas_call(
        kernel,
        out_shape=(
            jax.ShapeDtypeStruct((n_pad, dout_p), jnp.float32),
            jax.ShapeDtypeStruct((dst_tiles, 1, dout_p), jnp.float32),
            jax.ShapeDtypeStruct((dst_tiles, 1, dout_p), jnp.float32),
        ),
        grid_spec=pltpu.PrefetchScalarGridSpec(
            num_scalar_prefetch=4,
            grid=(dst_tiles, num_rels, src_tiles),
            in_specs=[
                pl.BlockSpec((1, tile_d, tile_s), adj_map),     # adjacency (bf16)
                pl.BlockSpec((1, tile_s, dout_p), msg_map),     # messages (bf16)
                pl.BlockSpec((tile_d, din), x_map),             # x (self-loop)
                pl.BlockSpec((din, dout_p), const_map),         # w_self
                pl.BlockSpec((1, dout_p), const_map),           # bias
            ],
            out_specs=(
                pl.BlockSpec((tile_d, dout_p), out_map),        # h (pre-BN)
                pl.BlockSpec((1, 1, dout_p), stat_map),         # sum(h)
                pl.BlockSpec((1, 1, dout_p), stat_map),         # sum(h^2)
            ),
            scratch_shapes=[pltpu.VMEM((tile_d, dout_p), jnp.float32)],
        ),
        compiler_params=pltpu.CompilerParams(
            dimension_semantics=("parallel", "arbitrary", "arbitrary"),
            vmem_limit_bytes=vmem_limit),
    )(occ, fi, fr, fk, adj, msg, x, w_self, bias)


# ---------------------------------------------------------------------------
# Kernel 3: BatchNorm1d (training-mode batch statistics over ALL real nodes)
# ---------------------------------------------------------------------------
def _batchnorm_kernel(inv_n, h_ref, ssum_ref, ssq_ref, gamma_ref, beta_ref,
                      out_ref):
    mean = jnp.sum(ssum_ref[...], axis=0) * inv_n          # (1, Dout_p)
    ex2 = jnp.sum(ssq_ref[...], axis=0) * inv_n
    var = jnp.maximum(ex2 - mean * mean, 0.0)
    inv_std = lax.rsqrt(var + 1e-5)
    out_ref[...] = ((h_ref[...] - mean) * inv_std * gamma_ref[...]
                    + beta_ref[...])


def _batchnorm(h, ssum, ssq, gamma, beta, *, tile_d, n_true):
    n_pad, dout_p = h.shape
    dst_tiles = n_pad // tile_d
    kernel = functools.partial(_batchnorm_kernel, 1.0 / float(n_true))
    return pl.pallas_call(
        kernel,
        out_shape=jax.ShapeDtypeStruct((n_pad, dout_p), jnp.float32),
        grid_spec=pltpu.PrefetchScalarGridSpec(
            num_scalar_prefetch=0,
            grid=(dst_tiles,),
            in_specs=[
                pl.BlockSpec((tile_d, dout_p), lambda i: (i, 0)),
                pl.BlockSpec((dst_tiles, 1, dout_p), lambda i: (0, 0, 0)),
                pl.BlockSpec((dst_tiles, 1, dout_p), lambda i: (0, 0, 0)),
                pl.BlockSpec((1, dout_p), lambda i: (0, 0)),
                pl.BlockSpec((1, dout_p), lambda i: (0, 0)),
            ],
            out_specs=pl.BlockSpec((tile_d, dout_p), lambda i: (i, 0)),
        ),
        compiler_params=pltpu.CompilerParams(
            dimension_semantics=("parallel",)),
    )(h, ssum, ssq, gamma, beta)


# ---------------------------------------------------------------------------
# Plain-JAX glue (basis composition, dense adjacency, block occupancy tables)
# ---------------------------------------------------------------------------
def compose_basis_weights(coeff, basis):
    """W[r] = sum_b coeff[r, b] * basis[b]  (DGL basis regularizer)."""
    return jnp.einsum("rb,bio->rio", coeff, basis)


def build_dense_adjacency(src, dst, etype, num_rels, n_pad):
    """A[r, v, u] = #edges u->v with relation r; bf16 (small ints are exact)."""
    adj = jnp.zeros((num_rels, n_pad, n_pad), jnp.float32)
    adj = adj.at[etype, dst, src].add(1.0)
    return adj.astype(jnp.bfloat16)


def build_fetch_tables(adj, tile_d, tile_s):
    """Occupancy flag + carried fetch coordinates per (dst_tile, rel, src_tile).

    Empty adjacency tiles reuse the previously fetched tile's block index so
    their DMA is skipped; the kernel gates the matmul with the occupancy flag.
    """
    num_rels, n_pad, _ = adj.shape
    di = n_pad // tile_d
    dk = n_pad // tile_s
    blk = adj.reshape(num_rels, di, tile_d, dk, tile_s)
    nz = jnp.any(blk != 0, axis=(2, 4))                    # (R, di, dk)
    occ = jnp.transpose(nz, (1, 0, 2)).reshape(-1)         # grid order (i, r, k)
    steps = jnp.arange(occ.shape[0], dtype=jnp.int32)
    last_nz = lax.cummax(jnp.where(occ, steps, -1), axis=0)
    first_nz = jnp.where(jnp.any(occ), jnp.argmax(occ).astype(jnp.int32), 0)
    carried = jnp.where(last_nz >= 0, last_nz, first_nz)
    fi = carried // (num_rels * dk)
    rem = carried % (num_rels * dk)
    fr = rem // dk
    fk = rem % dk
    return occ.astype(jnp.int32), fi, fr, fk


def _pad2(x, rows, cols):
    return jnp.pad(x, ((0, rows - x.shape[0]), (0, cols - x.shape[1])))


# ---------------------------------------------------------------------------
# Full forward
# ---------------------------------------------------------------------------
def rgcn_layer(occ, fi, fr, fk, adj, h, layer_params,
               *, tile_d, tile_s, n_true, dout_p):
    din = h.shape[1]
    w_rel = compose_basis_weights(layer_params["coeff"], layer_params["basis"])
    _, din0, dout = w_rel.shape
    # Pad Din up to the incoming feature width and Dout up to a lane-dense
    # multiple of 128.  Zero padding (incl. gamma/beta) keeps padded feature
    # columns exactly zero through every layer.
    w_rel = jnp.pad(w_rel, ((0, 0), (0, din - din0), (0, dout_p - dout)))
    w_self = _pad2(layer_params["w_self"], din, dout_p)
    bias = jnp.pad(layer_params["bias"], ((0, 0), (0, dout_p - dout)))
    gamma = jnp.pad(layer_params["gamma"], ((0, 0), (0, dout_p - dout)))
    beta = jnp.pad(layer_params["beta"], ((0, 0), (0, dout_p - dout)))

    msg = _compute_messages(h, w_rel, tile_s)               # once per relation
    h_pre, ssum, ssq = _rgcn_aggregate(occ, fi, fr, fk, adj, msg, h,
                                       w_self, bias,
                                       tile_d=tile_d, tile_s=tile_s,
                                       n_true=n_true)
    return _batchnorm(h_pre, ssum, ssq, gamma, beta,
                      tile_d=tile_d, n_true=n_true)


def rgcn_forward(x, src, dst, etype, params, num_rels, emb_dim, max_tile=512):
    """Full RGCN forward, JK='last'."""
    n = x.shape[0]
    if n <= max_tile:
        n_pad = _round_up(n, 8)
        tile_d = tile_s = n_pad
    else:
        n_pad = _round_up(n, max_tile)
        tile_d = tile_s = max_tile
    dout_p = _round_up(emb_dim, 128)

    adj = build_dense_adjacency(src, dst, etype, num_rels, n_pad)
    occ, fi, fr, fk = build_fetch_tables(adj, tile_d, tile_s)

    h = jnp.pad(x.astype(jnp.float32), ((0, n_pad - n), (0, 0)))
    for layer_params in params:
        h = rgcn_layer(occ, fi, fr, fk, adj, h, layer_params,
                       tile_d=tile_d, tile_s=tile_s, n_true=n, dout_p=dout_p)
    return h[:n, :emb_dim]          # JK == 'last'


def init_params(key, num_layers, num_rels, num_bases, inp_dim, emb_dim):
    params = []
    for layer in range(num_layers):
        din = inp_dim if layer == 0 else emb_dim
        dout = emb_dim
        key, k1, k2, k3 = jax.random.split(key, 4)
        scale = 1.0 / jnp.sqrt(jnp.float32(din))
        params.append({
            "basis": jax.random.normal(k1, (num_bases, din, dout), jnp.float32) * scale,
            "coeff": jax.random.normal(k2, (num_rels, num_bases), jnp.float32),
            "w_self": jax.random.normal(k3, (din, dout), jnp.float32) * scale,
            "bias": jnp.zeros((1, dout), jnp.float32),
            "gamma": jnp.ones((1, dout), jnp.float32),
            "beta": jnp.zeros((1, dout), jnp.float32),
        })
    return params


if __name__ == "__main__":
    # Small synthetic graph consistent with RGCN(num_layers=2, num_rels=3,
    # inp_dim=16, emb_dim=32, num_bases=4, dropout=0, JK='last')
    num_layers = 2
    num_rels = 3
    num_bases = 4
    inp_dim = 16
    emb_dim = 32
    num_nodes = 32
    num_edges = 64

    key = jax.random.PRNGKey(0)
    kx, ks, kd, kt, kp = jax.random.split(key, 5)

    x = jax.random.normal(kx, (num_nodes, inp_dim), jnp.float32)
    src = jax.random.randint(ks, (num_edges,), 0, num_nodes)
    dst = jax.random.randint(kd, (num_edges,), 0, num_nodes)
    etype = jax.random.randint(kt, (num_edges,), 0, num_rels)

    params = init_params(kp, num_layers, num_rels, num_bases, inp_dim, emb_dim)

    out = rgcn_forward(x, src, dst, etype, params, num_rels, emb_dim)
    out = jax.block_until_ready(out)
    assert out.shape == (num_nodes, emb_dim)
    assert bool(jnp.all(jnp.isfinite(out)))
    print("KERNEL_OK")
</pallas_src>

<mosaic_0001>
module attributes {stable_mosaic.version = 11 : i64} {
  func.func @_msg_kernel(%arg0: i32, %arg1: i32, %arg2: memref<32x16xf32, #tpu.memory_space<vmem>>, %arg3: memref<1x16x128xf32, #tpu.memory_space<vmem>>, %arg4: memref<1x32x128xbf16, #tpu.memory_space<vmem>>) attributes {dimension_semantics = [#tpu.dimension_semantics<parallel>, #tpu.dimension_semantics<parallel>], iteration_bounds = array<i64: 3, 1>, scalar_prefetch = 0 : i64, scratch_operands = 0 : i64, tpu.core_type = #tpu.core_type<tc>, window_params = [{transform_indices = @transform_0, window_bounds = array<i64: 32, 16>}, {transform_indices = @transform_1, window_bounds = array<i64: 1, 16, 128>}, {transform_indices = @transform_2, window_bounds = array<i64: 1, 32, 128>}]} {
    %c0 = arith.constant 0 : index
    %c0_0 = arith.constant 0 : index
    %0 = vector.load %arg2[%c0, %c0_0] : memref<32x16xf32, #tpu.memory_space<vmem>>, vector<32x16xf32>
    %c0_1 = arith.constant 0 : index
    %c0_2 = arith.constant 0 : index
    %c0_3 = arith.constant 0 : index
    %1 = vector.load %arg3[%c0_1, %c0_2, %c0_3] : memref<1x16x128xf32, #tpu.memory_space<vmem>>, vector<1x16x128xf32>
    %2 = vector.shape_cast %1 : vector<1x16x128xf32> to vector<16x128xf32>
    %cst = arith.constant dense<0.000000e+00> : vector<32x128xf32>
    %3 = tpu.matmul %0, %2, %cst {dimension_numbers = #tpu.dot_dimension_numbers<[1], [0], [0], [1], [0, 0, 1, 1], [], []>} : vector<32x16xf32>, vector<16x128xf32>, vector<32x128xf32> -> vector<32x128xf32>
    %4 = arith.truncf %3 : vector<32x128xf32> to vector<32x128xbf16>
    %c0_4 = arith.constant 0 : index
    %c0_5 = arith.constant 0 : index
    %c0_6 = arith.constant 0 : index
    %5 = vector.load %arg4[%c0_4, %c0_5, %c0_6] : memref<1x32x128xbf16, #tpu.memory_space<vmem>>, vector<1x32x128xbf16>
    %6 = vector.shape_cast %5 : vector<1x32x128xbf16> to vector<32x128xbf16>
    %7 = vector.shape_cast %4 : vector<32x128xbf16> to vector<1x32x128xbf16>
    tpu.vector_store %arg4[%c0_4, %c0_5, %c0_6], %7 {strides = array<i32>} : memref<1x32x128xbf16, #tpu.memory_space<vmem>>, vector<1x32x128xbf16>,
    return
  }
  func.func @transform_0(%arg0: i32, %arg1: i32) -> (i32, i32) {
    %c0_i32 = arith.constant 0 : i32
    %c0_i32_0 = arith.constant 0 : i32
    return %arg1, %c0_i32 : i32, i32
  }
  func.func @transform_1(%arg0: i32, %arg1: i32) -> (i32, i32, i32) {
    %c0_i32 = arith.constant 0 : i32
    %c0_i32_0 = arith.constant 0 : i32
    %c0_i32_1 = arith.constant 0 : i32
    return %arg0, %c0_i32, %c0_i32_0 : i32, i32, i32
  }
  func.func @transform_2(%arg0: i32, %arg1: i32) -> (i32, i32, i32) {
    %c0_i32 = arith.constant 0 : i32
    %c0_i32_0 = arith.constant 0 : i32
    return %arg0, %arg1, %c0_i32 : i32, i32, i32
  }
}

</mosaic_0001>

<llo_original>
// kernel: tpu_custom_call.1
$region0: #{tpu_custom_call.1}
  #allocation0 [shape = 'u32[]', space=smem, size = 0x4, offset = 0x4, fixed_abs, tag = 'smem constant byte address 0x4 - core index']
  #allocation1 [shape = 'u32[144,128]{1,0:T(1,128)}', space=vmem, size = 0x12000, scoped, tag = 'internal scratch']
  %s0 = inlined_call_operand.vmem [shape: f32[32,16], index: 0, kind: input, shape index: {}]
  %s1 = inlined_call_operand.vmem [shape: f32[3,16,128], index: 1, kind: input, shape index: {}]
  %s2 = inlined_call_operand.hbm [shape: bf16[3,32,128], index: 2, kind: output, shape index: {}]
  %s3 = sld [smem:[#allocation0]]
  $region41: #{tpu_custom_call.1} parent=0
    _
  %s5 = ssub.s32 1, %s3
  %s6 = scalar_select 0, %s5, %s3
  $region1: #{tpu_custom_call.1} parent=0
    #allocation2 [shape = 'u8[16384]{0}', space=vmem, size = 0x4000, scoped, tag = 'output window, operand 0']
    #allocation3 [shape = 's32[2]{0}', space=sflag, size = 0x8, scoped, tag = 'scoped memory for tpu_custom_call.1']
    %7 = vsyncpa [#allocation3], 0
    %s8 = scalar_lea.sflag [#allocation3], 1
    %9 = vsyncpa %s8, 0
    loop: start=0, step=1, limit=5
    $region2: #{tpu_custom_call.1} parent=1 // loop_pre_header
      _
    $region3: #{tpu_custom_call.1} parent=1 // loop_header
      %s11 = sphi 0, %s15
      %p12 = scmp.ge.s32.totalorder %s11, 5
      %s18 = sphi 0, %s30
      %s19 = sphi 0, %s26
      %s20 = sphi 0, %s18
      %s21 = sphi 0, %s19
      %s22 = sphi 0, %s20
      %s23 = sphi 0, %s21
      %s33 = sphi 0, %s35
      %s36 = sphi 0, %s33
      %s37 = sphi 0, %s36
      %s53 = sphi 0, %s37
      %s59 = sphi 0, %s61
      %s62 = sphi 0, %s59
      %s63 = sphi 0, %s62
      %s79 = sphi 0, %s63
      %s87 = sphi 0, %s89
      %s90 = sphi 0, %s87
      %s91 = sphi 0, %s90
      %s107 = sphi 0, %s91
    $region4: #{tpu_custom_call.1} parent=1 // loop_header_branch
      %14 = sbr.rel (%p12) target = $region8
    $region5: #{tpu_custom_call.1} parent=1 // loop_body
      %s16 = ssub.s32 %s11, 1
      %s17 = ssub.s32 %s11, 2
      %s24 = sadd.s32 1, %s19
      %p25 = scmp.ge.s32.totalorder %s24, 1
      %s26 = scalar_select %p25, 0, %s24
      %s27 = sadd.s32 1, %s18
      %s28 = scalar_select %p25, %s27, %s18
      %p29 = scmp.ge.s32.totalorder %s28, 3
      %s30 = scalar_select %p29, 0, %s28
      %s31 = ssub.s32 %s19, %s26
      %p32 = scmp.eq.s32.totalorder %s31, 0
      %s34 = sadd.s32 %s33, 1
      %s35 = scalar_select %p32, %s33, %s34
      %p38 = pneg %p32
      %p39 = scmp.eq.s32.totalorder %s11, 2
      %p40 = por %p38, %p39
      %p41 = scmp.ne.s32.totalorder %s33, %s36
      %p42 = scmp.eq.s32.totalorder %s11, 0
      %p43 = por %p41, %p42
      %p44 = scmp.ne.s32.totalorder %s33, %s36
      %p45 = scmp.eq.s32.totalorder %s16, 2
      %p46 = por %p44, %p45
      %p47 = scmp.ne.s32.totalorder %s36, %s37
      %p48 = scmp.eq.s32.totalorder %s16, 0
      %p49 = por %p47, %p48
      %p50 = scmp.ne.s32.totalorder %s36, %s37
      %p51 = scmp.eq.s32.totalorder %s17, 2
      %p52 = por %p50, %p51
      %p54 = scmp.ne.s32.totalorder %s37, %s53
      %p55 = scmp.eq.s32.totalorder %s17, 0
      %p56 = por %p54, %p55
      %s57 = ssub.s32 %s18, %s30
      %p58 = scmp.eq.s32.totalorder %s57, 0
      %s60 = sadd.s32 %s59, 1
      %s61 = scalar_select %p58, %s59, %s60
      %p64 = pneg %p58
      %p65 = scmp.eq.s32.totalorder %s11, 2
      %p66 = por %p64, %p65
      %p67 = scmp.ne.s32.totalorder %s59, %s62
      %p68 = scmp.eq.s32.totalorder %s11, 0
      %p69 = por %p67, %p68
      %p70 = scmp.ne.s32.totalorder %s59, %s62
      %p71 = scmp.eq.s32.totalorder %s16, 2
      %p72 = por %p70, %p71
      %p73 = scmp.ne.s32.totalorder %s62, %s63
      %p74 = scmp.eq.s32.totalorder %s16, 0
      %p75 = por %p73, %p74
      %p76 = scmp.ne.s32.totalorder %s62, %s63
      %p77 = scmp.eq.s32.totalorder %s17, 2
      %p78 = por %p76, %p77
      %p80 = scmp.ne.s32.totalorder %s63, %s79
      %p81 = scmp.eq.s32.totalorder %s17, 0
      %p82 = por %p80, %p81
      %s83 = ssub.s32 %s18, %s30
      %s84 = ssub.s32 %s19, %s26
      %s85 = sor.u32 %s83, %s84
      %p86 = scmp.eq.s32.totalorder %s85, 0
      %s88 = sadd.s32 %s87, 1
      %s89 = scalar_select %p86, %s87, %s88
      %p92 = pneg %p86
      %p93 = scmp.eq.s32.totalorder %s11, 2
      %p94 = por %p92, %p93
      %p95 = scmp.ne.s32.totalorder %s87, %s90
      %p96 = scmp.eq.s32.totalorder %s11, 0
      %p97 = por %p95, %p96
      %p98 = scmp.ne.s32.totalorder %s87, %s90
      %p99 = scmp.eq.s32.totalorder %s16, 2
      %p100 = por %p98, %p99
      %p101 = scmp.ne.s32.totalorder %s90, %s91
      %p102 = scmp.eq.s32.totalorder %s16, 0
      %p103 = por %p101, %p102
      %p104 = scmp.ne.s32.totalorder %s90, %s91
      %p105 = scmp.eq.s32.totalorder %s17, 2
      %p106 = por %p104, %p105
      %p108 = scmp.ne.s32.totalorder %s91, %s107
      %p109 = scmp.eq.s32.totalorder %s17, 0
      %p110 = por %p108, %p109
      %p111 = scmp.le.s32.totalorder 1, %s11
      %p112 = scmp.lt.s32.totalorder %s11, 4
      %p113 = pnand %p111, %p112
      %p114 = pneg %p113
      // Predicated region
      $region9: #{tpu_custom_call.1} parent=5 // pred_check
        _
      $region10: #{tpu_custom_call.1} parent=5 // pred_check_branch
        %116 = sbr.rel (%p113) target = $region12
      $region11: #{tpu_custom_call.1} parent=5 // pred_region
        %s117 = ssub.s32 %s11, 1
        // Predicated region
        $region13: #{tpu_custom_call.1} parent=11 // pred_check
          %p118 = pneg %p49
        $region14: #{tpu_custom_call.1} parent=11 // pred_check_branch
          %120 = sbr.rel (%p118) target = $region16
        $region15: #{tpu_custom_call.1} parent=11 // pred_region
          %s121 = smul.u32 4, %s21
          %p122 = scmp.lt.s32.totalorder %s121, 3
          %s123 = scalar_select %p122, %s121, 3
          %s124 = smul.addr %s123, 8
          %s125 = scalar_lea.vmem %s0, %s124
          %s126 = smul.u32 4, %s21
        $region16: #{tpu_custom_call.1} parent=11 // pred_fallthru
          _
      $region12: #{tpu_custom_call.1} parent=5 // pred_fallthru
        _
      %p127 = scmp.lt.s32.totalorder %s11, 3
      // Predicated region
      $region17: #{tpu_custom_call.1} parent=5 // pred_check
        %p128 = pneg %p127
      $region18: #{tpu_custom_call.1} parent=5 // pred_check_branch
        %130 = sbr.rel (%p128) target = $region20
      $region19: #{tpu_custom_call.1} parent=5 // pred_region
        // Predicated region
        $region21: #{tpu_custom_call.1} parent=19 // pred_check
          %p131 = pneg %p69
        $region22: #{tpu_custom_call.1} parent=19 // pred_check_branch
          %133 = sbr.rel (%p131) target = $region24
        $region23: #{tpu_custom_call.1} parent=19 // pred_region
          %p134 = scmp.lt.s32.totalorder %s18, 2
          %s135 = scalar_select %p134, %s18, 2
          %s136 = smul.addr %s135, 2
          %s137 = smul.addr %s136, 8
          %s138 = scalar_lea.vmem %s1, %s137
        $region24: #{tpu_custom_call.1} parent=19 // pred_fallthru
          _
      $region20: #{tpu_custom_call.1} parent=5 // pred_fallthru
        _
      %p139 = scmp.le.s32.totalorder 1, %s11
      %p140 = scmp.lt.s32.totalorder %s11, 4
      %p141 = pnand %p139, %p140
      %p142 = pneg %p141
      // Predicated region
      $region25: #{tpu_custom_call.1} parent=5 // pred_check
        _
      $region26: #{tpu_custom_call.1} parent=5 // pred_check_branch
        %144 = sbr.rel (%p141) target = $region28
      $region27: #{tpu_custom_call.1} parent=5 // pred_region
        %s145 = ssub.s32 %s11, 1
        %s146 = smul.u32 4, %s21
        %p147 = scmp.lt.s32.totalorder %s146, 3
        %s148 = scalar_select %p147, %s146, 3
        %s149 = smul.addr %s148, 8
        %s150 = scalar_lea.vmem %s0, %s149
        %p151 = pneg %p49
        %p152 = pneg %p46
        %p153 = scmp.lt.s32.totalorder %s20, 2
        %s154 = scalar_select %p153, %s20, 2
        %s155 = smul.addr %s154, 2
        %s156 = smul.addr %s155, 8
        %s157 = scalar_lea.vmem %s1, %s156
        %p158 = pneg %p75
        %p159 = pneg %p72
        %p160 = pneg %p103
        %p161 = pneg %p100
        %s162 = sand.u32 %s90, 1
        %s163 = scalar_lea.sflag [#allocation3], %s162
        %s164 = sand.u32 %s90, 1
        %s165 = smul.addr %s164, 16
        %s166 = scalar_lea.vmem [#allocation2], %s165
        %s167 = smul.u32 4, %s21
        %p168 = scmp.lt.s32.totalorder %s167, 3
        %s169 = scalar_select %p168, %s167, 3
        %s170 = smul.addr %s169, 8
        %s171 = scalar_lea.vmem %s0, %s170
        %s172 = smul.u32 4, %s21
        %p173 = scmp.lt.s32.totalorder %s20, 2
        %s174 = scalar_select %p173, %s20, 2
        %s175 = smul.addr %s174, 2
        %s176 = smul.addr %s175, 8
        %s177 = scalar_lea.vmem %s1, %s176
        %s178 = smul.u32 4, %s21
        %v179 = vld [vmem:[%s171] sm:$0xff]
        %v180 = vld [vmem:[%s171 + $0x8] sm:$0xff]
        %v181 = vld [vmem:[%s171 + $0x10] sm:$0xff]
        %v182 = vld [vmem:[%s171 + $0x18] sm:$0xff]
        %v183 = vld [vmem:[%s177] sm:$0xff]
        %v184 = vld [vmem:[%s177 + $0x8] sm:$0xff]
        %vm185 = vcmask 130048
        %v187 = vsel %vm185, %v179, 0
        %v190 = vsel %vm185, %v180, 0
        %v193 = vsel %vm185, %v181, 0
        %v196 = vsel %vm185, %v182, 0
        %198 = vmatprep.subr.mxu0 0.0
        %199 = vmatpush1.msra.mxu0 0.0
        %200 = vmatprep.subr.mxu0 0.0
        %201 = vmatpush1.msra.mxu0 0.0
        %202 = vmatprep.subr.mxu0 0.0
        %203 = vmatpush1.msra.mxu0 0.0
        %204 = vmatprep.subr.mxu0 0.0
        %205 = vmatpush1.msra.mxu0 0.0
        %206 = vmatprep.subr.mxu0 0.0
        %207 = vmatpush1.msra.mxu0 0.0
        %208 = vmatprep.subr.mxu0 0.0
        %209 = vmatpush1.msra.mxu0 0.0
        %210 = vmatprep.subr.mxu0 0.0
        %211 = vmatpush1.msra.mxu0 0.0
        %212 = vmatprep.subr.mxu0 0.0
        %213 = vmatpush1.msra.mxu0 0.0
        %214 = vmatprep.subr.mxu0 0.0
        %215 = vmatpush1.msra.mxu0 0.0
        %216 = vmatprep.subr.mxu0 0.0
        %217 = vmatpush1.msra.mxu0 0.0
        %218 = vmatprep.subr.mxu0 0.0
        %219 = vmatpush1.msra.mxu0 0.0
        %220 = vmatprep.subr.mxu0 0.0
        %221 = vmatpush1.msra.mxu0 0.0
        %222 = vmatprep.subr.mxu0 0.0
        %223 = vmatpush1.msra.mxu0 0.0
        %224 = vmatprep.subr.mxu0 0.0
        %225 = vmatpush1.msra.mxu0 0.0
        %226 = vmatprep.subr.mxu0 0.0
        %227 = vmatpush1.msra.mxu0 %v184
        %228 = vmatprep.subr.mxu0 0.0
        %229 = vmatpush1.msra.mxu0 %v183
        %230 = vmatprep.subr.mxu0 0.0
        %231 = vmatpush2.msra.mxu0 0.0
        %232 = vmatprep.subr.mxu0 0.0
        %233 = vmatpush2.msra.mxu0 0.0
        %234 = vmatprep.subr.mxu0 0.0
        %235 = vmatpush2.msra.mxu0 0.0
        %236 = vmatprep.subr.mxu0 0.0
        %237 = vmatpush2.msra.mxu0 0.0
        %238 = vmatprep.subr.mxu0 0.0
        %239 = vmatpush2.msra.mxu0 0.0
        %240 = vmatprep.subr.mxu0 0.0
        %241 = vmatpush2.msra.mxu0 0.0
        %242 = vmatprep.subr.mxu0 0.0
        %243 = vmatpush2.msra.mxu0 0.0
        %244 = vmatprep.subr.mxu0 0.0
        %245 = vmatpush2.msra.mxu0 0.0
        %246 = vmatprep.subr.mxu0 0.0
        %247 = vmatpush2.msra.mxu0 0.0
        %248 = vmatprep.subr.mxu0 0.0
        %249 = vmatpush2.msra.mxu0 0.0
        %250 = vmatprep.subr.mxu0 0.0
        %251 = vmatpush2.msra.mxu0 0.0
        %252 = vmatprep.subr.mxu0 0.0
        %253 = vmatpush2.msra.mxu0 0.0
        %254 = vmatprep.subr.mxu0 0.0
        %255 = vmatpush2.msra.mxu0 0.0
        %256 = vmatprep.subr.mxu0 0.0
        %257 = vmatpush2.msra.mxu0 0.0
        %258 = vmatprep.subr.mxu0 0.0
        %259 = vmatpush2.msra.mxu0 0.0
        %260 = vmatprep.subr.mxu0 0.0
        %261 = vmatpush2.msra.mxu0 0.0
        %262 = vmatprep.mubr.f32.mxu0 0.0
        %263 = vmatmul.mubr.f32.gmra.mxu0 %v187
        %v264 = vpop.f32.mrf.mxu0
        %v265 = vadd.f32 0.0, %v264
        %v266 = vpop.f32.mrf.mxu0
        %267 = vmatprep.mubr.f32.mxu0 0.0
        %268 = vmatmul.mubr.f32.gmra.mxu0 %v190
        %v269 = vpop.f32.mrf.mxu0
        %v270 = vadd.f32 0.0, %v269
        %v271 = vpop.f32.mrf.mxu0
        %272 = vmatprep.mubr.f32.mxu0 0.0
        %273 = vmatmul.mubr.f32.gmra.mxu0 %v193
        %v274 = vpop.f32.mrf.mxu0
        %v275 = vadd.f32 0.0, %v274
        %v276 = vpop.f32.mrf.mxu0
        %277 = vmatprep.mubr.f32.mxu0 0.0
        %278 = vmatmul.mubr.f32.gmra.mxu0 %v196
        %v279 = vpop.f32.mrf.mxu0
        %v280 = vadd.f32 0.0, %v279
        %v281 = vpop.f32.mrf.mxu0
        %282 = vdwg.mxu0
        %v283 = vpack.c.bf16 %v270, %v265
        %v284 = vpack.c.bf16 %v280, %v275
        %v287 = vunpack.c.l.b16 %v283
        %v288 = vunpack.c.h.b16 %v283
        %v289 = vunpack.c.l.b16 %v284
        %v290 = vunpack.c.h.b16 %v284
        %v291 = vpack.c.b16 %v287, %v287
        %v292 = vpack.c.b16 %v288, %v288
        %v293 = vpack.c.b16 %v289, %v289
        %v294 = vpack.c.b16 %v290, %v290
        %299 = vst [vmem:[%s166] sm:$0xf] %v291
        %300 = vst [vmem:[%s166 + $0x4] sm:$0xf] %v292
        %301 = vst [vmem:[%s166 + $0x8] sm:$0xf] %v293
        %302 = vst [vmem:[%s166 + $0xc] sm:$0xf] %v294
        %s303 = sand.u32 %s90, 1
        %s304 = scalar_lea.sflag [#allocation3], %s303
        %s305 = sand.u32 %s90, 1
        %s306 = smul.addr %s305, 16
        %s307 = scalar_lea.vmem [#allocation2], %s306
        // Predicated region
        $region29: #{tpu_custom_call.1} parent=27 // pred_check
          %p308 = pneg %p100
        $region30: #{tpu_custom_call.1} parent=27 // pred_check_branch
          %310 = sbr.rel (%p308) target = $region32
        $region31: #{tpu_custom_call.1} parent=27 // pred_region
          %s311 = smul.u32 4, %s21
          %s313 = ssub.s32 256, 256
          %314 = vsyncadd %s304, %s313
          %s315 = smul.addr %s20, 4
          %s316 = sadd.s32 %s311, %s315
          %s317 = smul.addr %s316, 64
          %s318 = scalar_lea.hbm %s2, %s317
          %s319 = sshll.u32 %s307, 4
          %s320 = int_to_ptr.vmem [resolvable:$true] %s319
          %325 = dma.vmem_to_hbm [thread:$0]  %s320, 256, %s318, %s304, 64, 64, 4
        $region32: #{tpu_custom_call.1} parent=27 // pred_fallthru
          _
      $region28: #{tpu_custom_call.1} parent=5 // pred_fallthru
        _
      %p326 = scmp.le.s32.totalorder 2, %s11
      // Predicated region
      $region33: #{tpu_custom_call.1} parent=5 // pred_check
        %p327 = pneg %p326
      $region34: #{tpu_custom_call.1} parent=5 // pred_check_branch
        %329 = sbr.rel (%p327) target = $region36
      $region35: #{tpu_custom_call.1} parent=5 // pred_region
        %s330 = ssub.s32 %s11, 2
        // Predicated region
        $region37: #{tpu_custom_call.1} parent=35 // pred_check
          %p331 = pneg %p106
        $region38: #{tpu_custom_call.1} parent=35 // pred_check_branch
          %333 = sbr.rel (%p331) target = $region40
        $region39: #{tpu_custom_call.1} parent=35 // pred_region
          %s334 = sand.u32 %s91, 1
          %s335 = scalar_lea.sflag [#allocation3], %s334
          %s336 = sand.u32 %s91, 1
          %s337 = smul.addr %s336, 16
          %s338 = scalar_lea.vmem [#allocation2], %s337
          %339 = dma.done %s335, 256
        $region40: #{tpu_custom_call.1} parent=35 // pred_fallthru
          _
      $region36: #{tpu_custom_call.1} parent=5 // pred_fallthru
        _
    $region6: #{tpu_custom_call.1} parent=1 // loop_footer
      %s15 = sadd.s32 1, %s11
    $region7: #{tpu_custom_call.1} parent=1 // loop_footer_branch
      %10 = sbr.rel target = $region3
    $region8: #{tpu_custom_call.1} parent=1 // loop_exit
      _
    %340 = vsyncpa [#allocation3], 1
    %s341 = scalar_lea.sflag [#allocation3], 1
    %342 = vsyncpa %s341, 1

</llo_original>
